<compile_context>
chip_gen: v5e
topology: v5e:2x2
jax: 0.10.0
libtpu: 0.0.40
codegen_flags: <defaults>
</compile_context>

<pallas_src>
import functools

import jax
import jax.numpy as jnp
from jax.experimental import pallas as pl
from jax.experimental.pallas import tpu as pltpu


def _round_up(x: int, m: int) -> int:
    return (x + m - 1) // m * m


def _encoder_manager_kernel(x_ref, w1_ref, b1_ref, w2_ref, b2_ref, out_ref, *, d1):
    """One node tile: merged 2-encoder MLP + sum-pool + fused concat-with-feat."""
    x = x_ref[...]                                    # [tn, D1+D2] f32
    cdt = w1_ref.dtype                                # compute/streaming dtype

    # Merged layer 1:  [x1 | x2] @ blockdiag(w1a, w1b) = [h_a | h_b]
    xc = x.astype(cdt)
    h = jnp.dot(xc, w1_ref[...], preferred_element_type=jnp.float32)
    h = jnp.maximum(h + b1_ref[...], 0.0)             # bias + ReLU in f32 (v5e-safe)

    # Merged layer 2 + sum pooling:  [h_a | h_b] @ [w2a ; w2b] = y_a + y_b
    y = jnp.dot(h.astype(cdt), w2_ref[...], preferred_element_type=jnp.float32)
    y = y + b2_ref[...]

    # Fused EncoderManager.forward concat:  out = [ pe_pooled | feat ]
    # (feat tail is a free static lane slice of the input block, kept exact f32)
    out_ref[...] = jnp.concatenate(
        [y.astype(out_ref.dtype), x[:, :d1].astype(out_ref.dtype)], axis=-1)


def merge_encoder_params(params, compute_dtype=jnp.float32):
    """Merge the two MLP encoders into one block-diagonal matmul chain.

    Called ONCE (outside the per-call forward):
      W1 = blockdiag(w1a, w1b)  [D1+D2, 2H]   b1 = [b1a | b1b]   (f32)
      W2 = [w2a ; w2b]          [2H, OUT]     b2 = b2a + b2b     (sum-pool fused)
    """
    d1, h = params["w1a"].shape
    d2 = params["w1b"].shape[0]
    w1 = jnp.zeros((d1 + d2, 2 * h), compute_dtype)
    w1 = w1.at[:d1, :h].set(params["w1a"].astype(compute_dtype))
    w1 = w1.at[d1:, h:].set(params["w1b"].astype(compute_dtype))
    b1 = jnp.concatenate([params["b1a"], params["b1b"]], axis=-1).astype(jnp.float32)
    w2 = jnp.concatenate([params["w2a"], params["w2b"]], axis=0).astype(compute_dtype)
    b2 = (params["b2a"] + params["b2b"]).astype(jnp.float32)
    return (w1, b1, w2, b2)


def encoder_manager_forward(feat, pos_enc, merged, *, tile_n=None):
    """Fused EncoderManager forward.

    feat:    [N, D1] float32 node features (node key "feat")
    pos_enc: [N, D2] float32 positional-encoding input (node key "pos_enc")
    merged:  tuple from merge_encoder_params (precomputed once).
    Returns the updated "feat": [N, OUT + D1] = cat(pe_pooled, feat, -1).
    """
    N, d1 = feat.shape
    n2, d2 = pos_enc.shape
    assert N == n2
    w1, b1, w2, b2 = merged
    din = d1 + d2
    two_h = w1.shape[1]
    out_dim = w2.shape[1]
    total = out_dim + d1

    # Single input slab [feat | pos_enc]: one BlockSpec / one DMA stream; the
    # kernel takes the feat tail as a static lane slice of the same block.
    x = jnp.concatenate(
        [feat.astype(jnp.float32), pos_enc.astype(jnp.float32)], axis=-1)

    # Node tiling: large tiles (per-grid-step overhead ~0.35us) but capped so
    # the grid keeps >= 2 tiles (both v7x TensorCores busy). Multiple of 8
    # sublanes; multiple of 256 once large. The ragged last tile needs no
    # wrapper padding: Pallas drops out-of-bounds output rows.
    if tile_n is None:
        cap = max(8, _round_up(pl.cdiv(N, 2), 8))   # at most ~half the rows/tile
        tile_n = min(1024, cap)
        if tile_n >= 512:
            tile_n = (tile_n // 256) * 256
    tile_n = max(8, _round_up(int(tile_n), 8))
    grid = (pl.cdiv(N, tile_n),)

    kernel = functools.partial(_encoder_manager_kernel, d1=d1)

    itemsize = jnp.dtype(w1.dtype).itemsize
    flops = 2 * N * (din * two_h + two_h * out_dim)
    bytes_accessed = (
        N * din * 4
        + w1.size * itemsize + w2.size * itemsize + b1.size * 4 + b2.size * 4
        + N * total * 4
    )

    return pl.pallas_call(
        kernel,
        out_shape=jax.ShapeDtypeStruct((N, total), jnp.float32),
        grid_spec=pltpu.PrefetchScalarGridSpec(
            num_scalar_prefetch=0,
            grid=grid,
            in_specs=[
                pl.BlockSpec((tile_n, din), lambda i: (i, 0)),      # [feat|pos_enc]
                pl.BlockSpec((din, two_h), lambda i: (0, 0)),       # merged W1 (resident)
                pl.BlockSpec((1, two_h), lambda i: (0, 0)),         # merged b1
                pl.BlockSpec((two_h, out_dim), lambda i: (0, 0)),   # merged W2
                pl.BlockSpec((1, out_dim), lambda i: (0, 0)),       # merged b2 (sum-pool)
            ],
            # Output block last dim == full array dim (48): no 128-lane write
            # inflation and no post-kernel slice copy.
            out_specs=pl.BlockSpec((tile_n, total), lambda i: (i, 0)),
        ),
        compiler_params=pltpu.CompilerParams(
            dimension_semantics=("parallel",),          # node tiles are independent
            vmem_limit_bytes=32 * 1024 * 1024,          # explicit budget (v7x-safe)
        ),
        cost_estimate=pl.CostEstimate(
            flops=flops, transcendentals=0, bytes_accessed=bytes_accessed),
    )(x, w1, b1, w2, b2)


def _init_params(key, d1, d2, hidden, out_dim):
    ks = jax.random.split(key, 4)
    scale = 0.1
    return {
        "w1a": scale * jax.random.normal(ks[0], (d1, hidden), jnp.float32),
        "b1a": jnp.zeros((1, hidden), jnp.float32),
        "w2a": scale * jax.random.normal(ks[1], (hidden, out_dim), jnp.float32),
        "b2a": jnp.zeros((1, out_dim), jnp.float32),
        "w1b": scale * jax.random.normal(ks[2], (d2, hidden), jnp.float32),
        "b1b": jnp.zeros((1, hidden), jnp.float32),
        "w2b": scale * jax.random.normal(ks[3], (hidden, out_dim), jnp.float32),
        "b2b": jnp.zeros((1, out_dim), jnp.float32),
    }


def _reference(feat, pos_enc, p):
    """Pure-JAX reference reproducing EncoderManager semantics."""
    y_a = jnp.maximum(feat @ p["w1a"] + p["b1a"], 0.0) @ p["w2a"] + p["b2a"]
    y_b = jnp.maximum(pos_enc @ p["w1b"] + p["b1b"], 0.0) @ p["w2b"] + p["b2b"]
    pe_cat = jnp.stack([y_a, y_b], axis=-1)        # [N, OUT, 2]
    pe_pooled = jnp.sum(pe_cat, axis=-1)           # pool == "sum"
    return jnp.concatenate([pe_pooled, feat], axis=-1)


if __name__ == "__main__":
    # N=60 is deliberately NOT a multiple of tile_n: the ragged last tile is
    # handled in-kernel (Pallas drops OOB output rows), with no wrapper-side
    # pad/slice HBM passes. tile_n=16 -> grid=(4,), exercising the pipeline
    # and the v7x 2-TC "parallel" sharding.
    N, D1, D2, HIDDEN, OUT = 60, 16, 8, 32, 32

    key = jax.random.PRNGKey(0)
    k_feat, k_pe, k_params = jax.random.split(key, 3)

    feat = jax.random.normal(k_feat, (N, D1), jnp.float32)       # node key "feat"
    pos_enc = jax.random.normal(k_pe, (N, D2), jnp.float32)      # node key "pos_enc"
    params = _init_params(k_params, D1, D2, HIDDEN, OUT)

    ref = _reference(feat, pos_enc, params)

    # Merged weights precomputed ONCE (hoisted out of the hot path).
    merged_f32 = merge_encoder_params(params, jnp.float32)
    fwd = jax.jit(functools.partial(encoder_manager_forward, tile_n=16))
    out = jax.block_until_ready(fwd(feat, pos_enc, merged_f32))
    assert out.shape == (N, OUT + D1), out.shape
    assert jnp.allclose(out, ref, atol=1e-5, rtol=1e-5), "f32 mismatch vs reference"

    # bf16 weight/matmul streaming path (f32 accumulation); default tile
    # heuristic -> grid=(2,), ragged last tile. feat output tail stays exact.
    merged_bf16 = merge_encoder_params(params, jnp.bfloat16)
    fwd_bf16 = jax.jit(encoder_manager_forward)
    out_bf16 = jax.block_until_ready(fwd_bf16(feat, pos_enc, merged_bf16))
    assert out_bf16.shape == (N, OUT + D1), out_bf16.shape
    assert jnp.allclose(out_bf16, ref, atol=5e-2, rtol=5e-2), "bf16 mismatch vs reference"
    assert jnp.array_equal(out_bf16[:, OUT:], feat), "feat tail must stay exact f32"

    # TODO(synk): laplacian_pe / signnet / gaussian_kernel / cat_mlp encoder
    # variants are full sub-networks with graph-dependent preprocessing; only
    # the "mlp" encoder path + stack/sum-pool/concat is implemented here.
    print("KERNEL_OK")
</pallas_src>

<mosaic_0001>
module attributes {stable_mosaic.version = 11 : i64} {
  func.func @_encoder_manager_kernel(%arg0: i32, %arg1: memref<16x24xf32, #tpu.memory_space<vmem>>, %arg2: memref<24x64xf32, #tpu.memory_space<vmem>>, %arg3: memref<1x64xf32, #tpu.memory_space<vmem>>, %arg4: memref<64x32xf32, #tpu.memory_space<vmem>>, %arg5: memref<1x32xf32, #tpu.memory_space<vmem>>, %arg6: memref<16x48xf32, #tpu.memory_space<vmem>>) attributes {dimension_semantics = [#tpu.dimension_semantics<parallel>], iteration_bounds = array<i64: 4>, scalar_prefetch = 0 : i64, scratch_operands = 0 : i64, tpu.core_type = #tpu.core_type<tc>, window_params = [{transform_indices = @transform_0, window_bounds = array<i64: 16, 24>}, {pipeline_mode = #tpu.pipeline_mode<synchronous>, transform_indices = @transform_1, window_bounds = array<i64: 24, 64>}, {pipeline_mode = #tpu.pipeline_mode<synchronous>, transform_indices = @transform_2, window_bounds = array<i64: 1, 64>}, {pipeline_mode = #tpu.pipeline_mode<synchronous>, transform_indices = @transform_3, window_bounds = array<i64: 64, 32>}, {pipeline_mode = #tpu.pipeline_mode<synchronous>, transform_indices = @transform_4, window_bounds = array<i64: 1, 32>}, {transform_indices = @transform_5, window_bounds = array<i64: 16, 48>}]} {
    %c0 = arith.constant 0 : index
    %c0_0 = arith.constant 0 : index
    %0 = vector.load %arg1[%c0, %c0_0] : memref<16x24xf32, #tpu.memory_space<vmem>>, vector<16x24xf32>
    %c0_1 = arith.constant 0 : index
    %c0_2 = arith.constant 0 : index
    %1 = vector.load %arg2[%c0_1, %c0_2] : memref<24x64xf32, #tpu.memory_space<vmem>>, vector<24x64xf32>
    %cst = arith.constant dense<0.000000e+00> : vector<16x64xf32>
    %2 = tpu.matmul %0, %1, %cst {dimension_numbers = #tpu.dot_dimension_numbers<[1], [0], [0], [1], [0, 0, 1, 1], [], []>} : vector<16x24xf32>, vector<24x64xf32>, vector<16x64xf32> -> vector<16x64xf32>
    %c0_3 = arith.constant 0 : index
    %c0_4 = arith.constant 0 : index
    %3 = vector.load %arg3[%c0_3, %c0_4] : memref<1x64xf32, #tpu.memory_space<vmem>>, vector<1x64xf32>
    %4 = vector.broadcast %3 : vector<1x64xf32> to vector<16x64xf32>
    %5 = arith.addf %2, %4 : vector<16x64xf32>
    %cst_5 = arith.constant 0.000000e+00 : f32
    %6 = vector.broadcast %cst_5 : f32 to vector<16x64xf32>
    %7 = arith.maximumf %5, %6 : vector<16x64xf32>
    %c0_6 = arith.constant 0 : index
    %c0_7 = arith.constant 0 : index
    %8 = vector.load %arg4[%c0_6, %c0_7] : memref<64x32xf32, #tpu.memory_space<vmem>>, vector<64x32xf32>
    %cst_8 = arith.constant dense<0.000000e+00> : vector<16x32xf32>
    %9 = tpu.matmul %7, %8, %cst_8 {dimension_numbers = #tpu.dot_dimension_numbers<[1], [0], [0], [1], [0, 0, 1, 1], [], []>} : vector<16x64xf32>, vector<64x32xf32>, vector<16x32xf32> -> vector<16x32xf32>
    %c0_9 = arith.constant 0 : index
    %c0_10 = arith.constant 0 : index
    %10 = vector.load %arg5[%c0_9, %c0_10] : memref<1x32xf32, #tpu.memory_space<vmem>>, vector<1x32xf32>
    %11 = vector.broadcast %10 : vector<1x32xf32> to vector<16x32xf32>
    %12 = arith.addf %9, %11 : vector<16x32xf32>
    %13 = vector.extract_strided_slice %0 {offsets = [0, 0], sizes = [16, 16], strides = [1, 1]} : vector<16x24xf32> to vector<16x16xf32>
    %14 = tpu.concatenate %12, %13 in 1 : vector<16x32xf32>, vector<16x16xf32> -> vector<16x48xf32>
    %c0_11 = arith.constant 0 : index
    %c0_12 = arith.constant 0 : index
    %15 = vector.load %arg6[%c0_11, %c0_12] : memref<16x48xf32, #tpu.memory_space<vmem>>, vector<16x48xf32>
    tpu.vector_store %arg6[%c0_11, %c0_12], %14 {strides = array<i32>} : memref<16x48xf32, #tpu.memory_space<vmem>>, vector<16x48xf32>,
    return
  }
  func.func @transform_0(%arg0: i32) -> (i32, i32) {
    %c0_i32 = arith.constant 0 : i32
    %c0_i32_0 = arith.constant 0 : i32
    return %arg0, %c0_i32 : i32, i32
  }
  func.func @transform_1(%arg0: i32) -> (i32, i32) {
    %c0_i32 = arith.constant 0 : i32
    %c0_i32_0 = arith.constant 0 : i32
    %c0_i32_1 = arith.constant 0 : i32
    return %c0_i32, %c0_i32_0 : i32, i32
  }
  func.func @transform_2(%arg0: i32) -> (i32, i32) {
    %c0_i32 = arith.constant 0 : i32
    %c0_i32_0 = arith.constant 0 : i32
    %c0_i32_1 = arith.constant 0 : i32
    return %c0_i32, %c0_i32_0 : i32, i32
  }
  func.func @transform_3(%arg0: i32) -> (i32, i32) {
    %c0_i32 = arith.constant 0 : i32
    %c0_i32_0 = arith.constant 0 : i32
    %c0_i32_1 = arith.constant 0 : i32
    return %c0_i32, %c0_i32_0 : i32, i32
  }
  func.func @transform_4(%arg0: i32) -> (i32, i32) {
    %c0_i32 = arith.constant 0 : i32
    %c0_i32_0 = arith.constant 0 : i32
    %c0_i32_1 = arith.constant 0 : i32
    return %c0_i32, %c0_i32_0 : i32, i32
  }
  func.func @transform_5(%arg0: i32) -> (i32, i32) {
    %c0_i32 = arith.constant 0 : i32
    %c0_i32_0 = arith.constant 0 : i32
    return %arg0, %c0_i32 : i32, i32
  }
}

</mosaic_0001>

<llo_original>
// kernel: encoder_manager_forward.1
$region0: #{encoder_manager_forward.1}
  #allocation0 [shape = 'u32[]', space=smem, size = 0x4, offset = 0x4, fixed_abs, tag = 'smem constant byte address 0x4 - core index']
  #allocation1 [shape = 'u32[72,128]{1,0:T(1,128)}', space=vmem, size = 0x9000, scoped, tag = 'internal scratch']
  %s0 = inlined_call_operand.vmem [shape: f32[60,24], index: 0, kind: input, shape index: {}]
  %s1 = inlined_call_operand.vmem [shape: f32[24,64], index: 1, kind: input, shape index: {}]
  %s2 = inlined_call_operand.vmem [shape: f32[1,64], index: 2, kind: input, shape index: {}]
  %s3 = inlined_call_operand.vmem [shape: f32[64,32], index: 3, kind: input, shape index: {}]
  %s4 = inlined_call_operand.vmem [shape: f32[1,32], index: 4, kind: input, shape index: {}]
  %s5 = inlined_call_operand.vmem [shape: f32[60,48], index: 5, kind: output, shape index: {}]
  %s6 = sld [smem:[#allocation0]]
  $region53: #{encoder_manager_forward.1} parent=0
    _
  %s8 = ssub.s32 1, %s6
  %s9 = scalar_select 0, %s8, %s6
  loop: start=0, step=1, limit=6
  $region2: #{encoder_manager_forward.1} parent=0 // loop_pre_header
    _
  $region3: #{encoder_manager_forward.1} parent=0 // loop_header
    %s11 = sphi 0, %s15
    %p12 = scmp.ge.s32.totalorder %s11, 6
    %s21 = sphi 0, %s23
    %s24 = sphi 0, %s21
    %s25 = sphi 0, %s24
    %s41 = sphi 0, %s25
    %s45 = sphi 0, %s45
    %s47 = sphi 0, %s45
    %s48 = sphi 0, %s47
    %s62 = sphi 0, %s48
    %s66 = sphi 0, %s66
    %s68 = sphi 0, %s66
    %s69 = sphi 0, %s68
    %s83 = sphi 0, %s69
    %s87 = sphi 0, %s87
    %s89 = sphi 0, %s87
    %s90 = sphi 0, %s89
    %s104 = sphi 0, %s90
    %s108 = sphi 0, %s108
    %s110 = sphi 0, %s108
    %s111 = sphi 0, %s110
    %s125 = sphi 0, %s111
    %s131 = sphi 0, %s133
    %s134 = sphi 0, %s131
    %s135 = sphi 0, %s134
    %s151 = sphi 0, %s135
  $region4: #{encoder_manager_forward.1} parent=0 // loop_header_branch
    %14 = sbr.rel (%p12) target = $region8
  $region5: #{encoder_manager_forward.1} parent=0 // loop_body
    %s16 = ssub.s32 %s11, 1
    %s17 = ssub.s32 %s11, 2
    %s18 = sadd.s32 %s11, 1
    %s19 = ssub.s32 %s11, %s18
    %p20 = scmp.eq.s32.totalorder %s19, 0
    %s22 = sadd.s32 %s21, 1
    %s23 = scalar_select %p20, %s21, %s22
    %p26 = pneg %p20
    %p27 = scmp.eq.s32.totalorder %s11, 3
    %p28 = por %p26, %p27
    %p29 = scmp.ne.s32.totalorder %s21, %s24
    %p30 = scmp.eq.s32.totalorder %s11, 0
    %p31 = por %p29, %p30
    %p32 = scmp.ne.s32.totalorder %s21, %s24
    %p33 = scmp.eq.s32.totalorder %s16, 3
    %p34 = por %p32, %p33
    %p35 = scmp.ne.s32.totalorder %s24, %s25
    %p36 = scmp.eq.s32.totalorder %s16, 0
    %p37 = por %p35, %p36
    %p38 = scmp.ne.s32.totalorder %s24, %s25
    %p39 = scmp.eq.s32.totalorder %s17, 3
    %p40 = por %p38, %p39
    %p42 = scmp.ne.s32.totalorder %s25, %s41
    %p43 = scmp.eq.s32.totalorder %s17, 0
    %p44 = por %p42, %p43
    %s46 = sadd.s32 %s45, 1
    %p49 = scmp.eq.s32.totalorder %s11, 3
    %p50 = scmp.ne.s32.totalorder %s45, %s47
    %p51 = scmp.eq.s32.totalorder %s11, 0
    %p52 = por %p50, %p51
    %p53 = scmp.ne.s32.totalorder %s45, %s47
    %p54 = scmp.eq.s32.totalorder %s16, 3
    %p55 = por %p53, %p54
    %p56 = scmp.ne.s32.totalorder %s47, %s48
    %p57 = scmp.eq.s32.totalorder %s16, 0
    %p58 = por %p56, %p57
    %p59 = scmp.ne.s32.totalorder %s47, %s48
    %p60 = scmp.eq.s32.totalorder %s17, 3
    %p61 = por %p59, %p60
    %p63 = scmp.ne.s32.totalorder %s48, %s62
    %p64 = scmp.eq.s32.totalorder %s17, 0
    %p65 = por %p63, %p64
    %s67 = sadd.s32 %s66, 1
    %p70 = scmp.eq.s32.totalorder %s11, 3
    %p71 = scmp.ne.s32.totalorder %s66, %s68
    %p72 = scmp.eq.s32.totalorder %s11, 0
    %p73 = por %p71, %p72
    %p74 = scmp.ne.s32.totalorder %s66, %s68
    %p75 = scmp.eq.s32.totalorder %s16, 3
    %p76 = por %p74, %p75
    %p77 = scmp.ne.s32.totalorder %s68, %s69
    %p78 = scmp.eq.s32.totalorder %s16, 0
    %p79 = por %p77, %p78
    %p80 = scmp.ne.s32.totalorder %s68, %s69
    %p81 = scmp.eq.s32.totalorder %s17, 3
    %p82 = por %p80, %p81
    %p84 = scmp.ne.s32.totalorder %s69, %s83
    %p85 = scmp.eq.s32.totalorder %s17, 0
    %p86 = por %p84, %p85
    %s88 = sadd.s32 %s87, 1
    %p91 = scmp.eq.s32.totalorder %s11, 3
    %p92 = scmp.ne.s32.totalorder %s87, %s89
    %p93 = scmp.eq.s32.totalorder %s11, 0
    %p94 = por %p92, %p93
    %p95 = scmp.ne.s32.totalorder %s87, %s89
    %p96 = scmp.eq.s32.totalorder %s16, 3
    %p97 = por %p95, %p96
    %p98 = scmp.ne.s32.totalorder %s89, %s90
    %p99 = scmp.eq.s32.totalorder %s16, 0
    %p100 = por %p98, %p99
    %p101 = scmp.ne.s32.totalorder %s89, %s90
    %p102 = scmp.eq.s32.totalorder %s17, 3
    %p103 = por %p101, %p102
    %p105 = scmp.ne.s32.totalorder %s90, %s104
    %p106 = scmp.eq.s32.totalorder %s17, 0
    %p107 = por %p105, %p106
    %s109 = sadd.s32 %s108, 1
    %p112 = scmp.eq.s32.totalorder %s11, 3
    %p113 = scmp.ne.s32.totalorder %s108, %s110
    %p114 = scmp.eq.s32.totalorder %s11, 0
    %p115 = por %p113, %p114
    %p116 = scmp.ne.s32.totalorder %s108, %s110
    %p117 = scmp.eq.s32.totalorder %s16, 3
    %p118 = por %p116, %p117
    %p119 = scmp.ne.s32.totalorder %s110, %s111
    %p120 = scmp.eq.s32.totalorder %s16, 0
    %p121 = por %p119, %p120
    %p122 = scmp.ne.s32.totalorder %s110, %s111
    %p123 = scmp.eq.s32.totalorder %s17, 3
    %p124 = por %p122, %p123
    %p126 = scmp.ne.s32.totalorder %s111, %s125
    %p127 = scmp.eq.s32.totalorder %s17, 0
    %p128 = por %p126, %p127
    %s129 = ssub.s32 %s11, %s18
    %p130 = scmp.eq.s32.totalorder %s129, 0
    %s132 = sadd.s32 %s131, 1
    %s133 = scalar_select %p130, %s131, %s132
    %p136 = pneg %p130
    %p137 = scmp.eq.s32.totalorder %s11, 3
    %p138 = por %p136, %p137
    %p139 = scmp.ne.s32.totalorder %s131, %s134
    %p140 = scmp.eq.s32.totalorder %s11, 0
    %p141 = por %p139, %p140
    %p142 = scmp.ne.s32.totalorder %s131, %s134
    %p143 = scmp.eq.s32.totalorder %s16, 3
    %p144 = por %p142, %p143
    %p145 = scmp.ne.s32.totalorder %s134, %s135
    %p146 = scmp.eq.s32.totalorder %s16, 0
    %p147 = por %p145, %p146
    %p148 = scmp.ne.s32.totalorder %s134, %s135
    %p149 = scmp.eq.s32.totalorder %s17, 3
    %p150 = por %p148, %p149
    %p152 = scmp.ne.s32.totalorder %s135, %s151
    %p153 = scmp.eq.s32.totalorder %s17, 0
    %p154 = por %p152, %p153
    %p155 = scmp.le.s32.totalorder 1, %s11
    %p156 = scmp.lt.s32.totalorder %s11, 5
    %p157 = pnand %p155, %p156
    %p158 = pneg %p157
    // Predicated region
    $region9: #{encoder_manager_forward.1} parent=5 // pred_check
      _
    $region10: #{encoder_manager_forward.1} parent=5 // pred_check_branch
      %160 = sbr.rel (%p157) target = $region12
    $region11: #{encoder_manager_forward.1} parent=5 // pred_region
      %s161 = ssub.s32 %s11, 1
      // Predicated region
      $region13: #{encoder_manager_forward.1} parent=11 // pred_check
        %p162 = pneg %p58
      $region14: #{encoder_manager_forward.1} parent=11 // pred_check_branch
        %164 = sbr.rel (%p162) target = $region16
      $region15: #{encoder_manager_forward.1} parent=11 // pred_region
        _
      $region16: #{encoder_manager_forward.1} parent=11 // pred_fallthru
        _
      // Predicated region
      $region17: #{encoder_manager_forward.1} parent=11 // pred_check
        %p165 = pneg %p79
      $region18: #{encoder_manager_forward.1} parent=11 // pred_check_branch
        %167 = sbr.rel (%p165) target = $region20
      $region19: #{encoder_manager_forward.1} parent=11 // pred_region
        _
      $region20: #{encoder_manager_forward.1} parent=11 // pred_fallthru
        _
      // Predicated region
      $region21: #{encoder_manager_forward.1} parent=11 // pred_check
        %p168 = pneg %p100
      $region22: #{encoder_manager_forward.1} parent=11 // pred_check_branch
        %170 = sbr.rel (%p168) target = $region24
      $region23: #{encoder_manager_forward.1} parent=11 // pred_region
        _
      $region24: #{encoder_manager_forward.1} parent=11 // pred_fallthru
        _
      // Predicated region
      $region25: #{encoder_manager_forward.1} parent=11 // pred_check
        %p171 = pneg %p121
      $region26: #{encoder_manager_forward.1} parent=11 // pred_check_branch
        %173 = sbr.rel (%p171) target = $region28
      $region27: #{encoder_manager_forward.1} parent=11 // pred_region
        _
      $region28: #{encoder_manager_forward.1} parent=11 // pred_fallthru
        _
    $region12: #{encoder_manager_forward.1} parent=5 // pred_fallthru
      _
    %p174 = scmp.lt.s32.totalorder %s11, 4
    // Predicated region
    $region29: #{encoder_manager_forward.1} parent=5 // pred_check
      %p175 = pneg %p174
    $region30: #{encoder_manager_forward.1} parent=5 // pred_check_branch
      %177 = sbr.rel (%p175) target = $region32
    $region31: #{encoder_manager_forward.1} parent=5 // pred_region
      // Predicated region
      $region33: #{encoder_manager_forward.1} parent=31 // pred_check
        %p178 = pneg %p31
      $region34: #{encoder_manager_forward.1} parent=31 // pred_check_branch
        %180 = sbr.rel (%p178) target = $region36
      $region35: #{encoder_manager_forward.1} parent=31 // pred_region
        %s181 = smul.u32 2, %s11
        %p182 = scmp.lt.s32.totalorder %s181, 7
        %s183 = scalar_select %p182, %s181, 7
        %s184 = smul.addr %s183, 8
        %s185 = scalar_lea.vmem %s0, %s184
        %s186 = smul.u32 2, %s11
      $region36: #{encoder_manager_forward.1} parent=31 // pred_fallthru
        _
    $region32: #{encoder_manager_forward.1} parent=5 // pred_fallthru
      _
    %p187 = scmp.le.s32.totalorder 1, %s11
    %p188 = scmp.lt.s32.totalorder %s11, 5
    %p189 = pnand %p187, %p188
    %p190 = pneg %p189
    // Predicated region
    $region37: #{encoder_manager_forward.1} parent=5 // pred_check
      _
    $region38: #{encoder_manager_forward.1} parent=5 // pred_check_branch
      %192 = sbr.rel (%p189) target = $region40
    $region39: #{encoder_manager_forward.1} parent=5 // pred_region
      %s193 = ssub.s32 %s11, 1
      %s194 = smul.u32 2, %s16
      %p195 = scmp.lt.s32.totalorder %s194, 7
      %s196 = scalar_select %p195, %s194, 7
      %s197 = smul.addr %s196, 8
      %s198 = scalar_lea.vmem %s0, %s197
      %p199 = pneg %p37
      %p200 = pneg %p34
      %p201 = pneg %p58
      %p202 = pneg %p55
      %p203 = pneg %p79
      %p204 = pneg %p76
      %p205 = pneg %p100
      %p206 = pneg %p97
      %p207 = pneg %p121
      %p208 = pneg %p118
      %p209 = pneg %p147
      %p210 = pneg %p144
      %s211 = smul.u32 2, %s16
      %p212 = scmp.lt.s32.totalorder %s211, 7
      %s213 = scalar_select %p212, %s211, 7
      %s214 = smul.addr %s213, 8
      %s215 = scalar_lea.vmem %s5, %s214
      %s216 = smul.u32 2, %s16
      %p217 = scmp.lt.s32.totalorder %s216, 7
      %s218 = scalar_select %p217, %s216, 7
      %s219 = smul.addr %s218, 8
      %s220 = scalar_lea.vmem %s0, %s219
      %s221 = smul.u32 2, %s16
      %s222 = smul.u32 2, %s16
      %p223 = scmp.lt.s32.totalorder %s222, 7
      %s224 = scalar_select %p223, %s222, 7
      %s225 = smul.addr %s224, 8
      %s226 = scalar_lea.vmem %s5, %s225
      %s227 = smul.u32 2, %s16
      %v228 = vld [vmem:[%s220] sm:$0xff]
      %v229 = vld [vmem:[%s220 + $0x8] sm:$0xff]
      %v230 = vld [vmem:[%s1] sm:$0xff]
      %v231 = vld [vmem:[%s1 + $0x8] sm:$0xff]
      %v232 = vld [vmem:[%s1 + $0x10] sm:$0xff]
      %v233 = vld [vmem:[%s2] sm:$0x1]
      %v235 = vperm.slane %v233, 0
      %vm237 = vcmask 195584
      %v239 = vsel %vm237, %v228, 0
      %v242 = vsel %vm237, %v229, 0
      %244 = vmatpush.msra.mxu0 0.0
      %245 = vmatpush.msra.mxu0 0.0
      %246 = vmatpush.msra.mxu0 0.0
      %247 = vmatpush.msra.mxu0 0.0
      %248 = vmatpush.msra.mxu0 0.0
      %249 = vmatpush.msra.mxu0 0.0
      %250 = vmatpush.msra.mxu0 0.0
      %251 = vmatpush.msra.mxu0 0.0
      %252 = vmatpush.msra.mxu0 0.0
      %253 = vmatpush.msra.mxu0 0.0
      %254 = vmatpush.msra.mxu0 0.0
      %255 = vmatpush.msra.mxu0 0.0
      %256 = vmatpush.msra.mxu0 0.0
      %257 = vmatpush.msra.mxu0 %v232
      %258 = vmatpush.msra.mxu0 %v231
      %259 = vmatpush.msra.mxu0 %v230
      %260 = vmatmul.f32.gmra.mxu0 %v239
      %v261 = vpop.f32.mrf.mxu0
      %v262 = vadd.f32 %v235, %v261
      %263 = vmatmul.f32.gmra.mxu0 %v242
      %v264 = vpop.f32.mrf.mxu0
      %v265 = vadd.f32 %v235, %v264
      %266 = vdwg.mxu0
      %v267 = vmax.f32 %v262, 0.0
      %v268 = vmax.f32 %v265, 0.0
      %v269 = vld [vmem:[%s3] sm:$0xff]
      %v270 = vld [vmem:[%s3 + $0x8] sm:$0xff]
      %v271 = vld [vmem:[%s3 + $0x10] sm:$0xff]
      %v272 = vld [vmem:[%s3 + $0x18] sm:$0xff]
      %v273 = vld [vmem:[%s3 + $0x20] sm:$0xff]
      %v274 = vld [vmem:[%s3 + $0x28] sm:$0xff]
      %v275 = vld [vmem:[%s3 + $0x30] sm:$0xff]
      %v276 = vld [vmem:[%s3 + $0x38] sm:$0xff]
      %v277 = vld [vmem:[%s4] sm:$0x1]
      %v279 = vperm.slane %v277, 0
      %vm281 = vcmask 523264
      %v283 = vsel %vm281, %v267, 0
      %v286 = vsel %vm281, %v268, 0
      %288 = vmatpush.msra.mxu0 0.0
      %289 = vmatpush.msra.mxu0 0.0
      %290 = vmatpush.msra.mxu0 0.0
      %291 = vmatpush.msra.mxu0 0.0
      %292 = vmatpush.msra.mxu0 0.0
      %293 = vmatpush.msra.mxu0 0.0
      %294 = vmatpush.msra.mxu0 0.0
      %295 = vmatpush.msra.mxu0 0.0
      %296 = vmatpush.msra.mxu0 %v276
      %297 = vmatpush.msra.mxu0 %v275
      %298 = vmatpush.msra.mxu0 %v274
      %299 = vmatpush.msra.mxu0 %v273
      %300 = vmatpush.msra.mxu0 %v272
      %301 = vmatpush.msra.mxu0 %v271
      %302 = vmatpush.msra.mxu0 %v270
      %303 = vmatpush.msra.mxu0 %v269
      %304 = vmatmul.f32.gmra.mxu0 %v283
      %v305 = vpop.f32.mrf.mxu0
      %v306 = vadd.f32 %v279, %v305
      %307 = vmatmul.f32.gmra.mxu0 %v286
      %v308 = vpop.f32.mrf.mxu0
      %v309 = vadd.f32 %v279, %v308
      %310 = vdwg.mxu0
      %311 = vrot.lane.b32.xlu0 %v228, 32
      %v312 = vpop.permute.xlu0 %311
      %313 = vrot.lane.b32.xlu0 %v229, 32
      %v314 = vpop.permute.xlu0 %313
      %vm317 = vcmask 261120
      %v318 = vsel %vm317, %v306, %v312
      %v319 = vsel %vm317, %v309, %v314
      %vm320 = vcmask 392192
      %321 = vst.msk [vmem:[%s226] sm:$0xff] %vm320, %v318
      %322 = vst.msk [vmem:[%s226 + $0x8] sm:$0xff] %vm320, %v319
      %s323 = smul.u32 2, %s16
      %p324 = scmp.lt.s32.totalorder %s323, 7
      %s325 = scalar_select %p324, %s323, 7
      %s326 = smul.addr %s325, 8
      %s327 = scalar_lea.vmem %s5, %s326
      // Predicated region
      $region41: #{encoder_manager_forward.1} parent=39 // pred_check
        %p328 = pneg %p144
      $region42: #{encoder_manager_forward.1} parent=39 // pred_check_branch
        %330 = sbr.rel (%p328) target = $region44
      $region43: #{encoder_manager_forward.1} parent=39 // pred_region
        %s331 = smul.u32 2, %s16
      $region44: #{encoder_manager_forward.1} parent=39 // pred_fallthru
        _
    $region40: #{encoder_manager_forward.1} parent=5 // pred_fallthru
      _
    %p332 = scmp.le.s32.totalorder 2, %s11
    // Predicated region
    $region45: #{encoder_manager_forward.1} parent=5 // pred_check
      %p333 = pneg %p332
    $region46: #{encoder_manager_forward.1} parent=5 // pred_check_branch
      %335 = sbr.rel (%p333) target = $region48
    $region47: #{encoder_manager_forward.1} parent=5 // pred_region
      %s336 = ssub.s32 %s11, 2
      // Predicated region
      $region49: #{encoder_manager_forward.1} parent=47 // pred_check
        %p337 = pneg %p150
      $region50: #{encoder_manager_forward.1} parent=47 // pred_check_branch
        %339 = sbr.rel (%p337) target = $region52
      $region51: #{encoder_manager_forward.1} parent=47 // pred_region
        %s340 = smul.u32 2, %s17
        %p341 = scmp.lt.s32.totalorder %s340, 7
        %s342 = scalar_select %p341, %s340, 7
        %s343 = smul.addr %s342, 8
        %s344 = scalar_lea.vmem %s5, %s343
      $region52: #{encoder_manager_forward.1} parent=47 // pred_fallthru
        _
    $region48: #{encoder_manager_forward.1} parent=5 // pred_fallthru
      _
  $region6: #{encoder_manager_forward.1} parent=0 // loop_footer
    %s15 = sadd.s32 1, %s11
  $region7: #{encoder_manager_forward.1} parent=0 // loop_footer_branch
    %10 = sbr.rel target = $region3
  $region8: #{encoder_manager_forward.1} parent=0 // loop_exit
    _

</llo_original>
